<compile_context>
chip_gen: v6e
topology: v6e:2x2x1
jax: 0.10.0
libtpu: 0.0.40
codegen_flags: <defaults>
</compile_context>

<pallas_src>
import functools
from typing import NamedTuple

import jax
import jax.numpy as jnp
from jax.experimental import pallas as pl
from jax.experimental.pallas import tpu as pltpu

_LANE = 128


def _round_up(x, m):
    return ((x + m - 1) // m) * m


def _cdiv(a, b):
    return -(-a // b)


# -----------------------------------------------------------------------------
# Hardware discovery (cached): generation, physical VMEM, TensorCores per chip.
# -----------------------------------------------------------------------------
_HW_INFO = None


def _hw_info():
    global _HW_INFO
    if _HW_INFO is not None:
        return _HW_INFO
    kind = ""
    try:
        kind = jax.devices()[0].device_kind.lower()
    except Exception:
        kind = ""
    if "v7" in kind:
        gen = 7
    elif "v6" in kind:
        gen = 6
    elif "v5" in kind:
        gen = 5
    else:
        gen = 6  # unknown: assume the common case
    vmem_bytes = None
    try:
        info = pltpu.get_tpu_info()
        vmem_bytes = int(getattr(info, "vmem_capacity_bytes"))
    except Exception:
        vmem_bytes = None
    if not vmem_bytes:
        vmem_bytes = (64 << 20) if gen >= 7 else (128 << 20)
    num_tc = 2 if gen >= 7 else 1
    _HW_INFO = (gen, vmem_bytes, num_tc)
    return _HW_INFO


# -----------------------------------------------------------------------------
# One-time probe: does this jax build accept pipeline_mode=pl.Buffered(1)?
# (Tiny throwaway kernel -> real kernel compile errors are never masked.)
# -----------------------------------------------------------------------------
_SINGLE_BUFFER_OK = None


def _single_buffer_supported():
    global _SINGLE_BUFFER_OK
    if _SINGLE_BUFFER_OK is not None:
        return _SINGLE_BUFFER_OK
    if not hasattr(pl, "Buffered"):
        _SINGLE_BUFFER_OK = False
        return False

    def probe(a_ref, c_ref, o_ref):
        o_ref[...] = a_ref[...] + c_ref[...]

    try:
        out = pl.pallas_call(
            probe,
            out_shape=jax.ShapeDtypeStruct((16, 128), jnp.float32),
            grid=(2,),
            in_specs=[
                pl.BlockSpec((8, 128), lambda i: (i, 0)),
                pl.BlockSpec((8, 128), lambda i: (0, 0),
                             pipeline_mode=pl.Buffered(1)),
            ],
            out_specs=pl.BlockSpec((8, 128), lambda i: (i, 0)),
        )(jnp.zeros((16, 128), jnp.float32), jnp.ones((8, 128), jnp.float32))
        jax.block_until_ready(out)
        _SINGLE_BUFFER_OK = True
    except Exception:
        _SINGLE_BUFFER_OK = False
    return _SINGLE_BUFFER_OK


# -----------------------------------------------------------------------------
# Kernels
# -----------------------------------------------------------------------------
def _mlp_kernel_resident(x_ref, w1_ref, b1_ref, w2_ref, b2_ref, w3_ref, b3_ref, o_ref):
    # All three weights VMEM-resident; one MXU pass per layer, f32 accumulation,
    # f32 bias-add / ReLU on the VPU (works on v5e which has no bf16 VALU).
    h = jnp.dot(x_ref[...], w1_ref[...], preferred_element_type=jnp.float32)
    h = jnp.maximum(h + b1_ref[...], 0.0)
    h = jnp.dot(h.astype(w2_ref.dtype), w2_ref[...], preferred_element_type=jnp.float32)
    h = jnp.maximum(h + b2_ref[...], 0.0)
    y = jnp.dot(h.astype(w3_ref.dtype), w3_ref[...], preferred_element_type=jnp.float32)
    o_ref[...] = (y + b3_ref[...]).astype(o_ref.dtype)


def _mlp_kernel_htiled(x_ref, w1_ref, b1_ref, w2_ref, b2_ref, w3_ref, b3_ref,
                       o_ref, acc_ref):
    # Hidden-dim-tiled path: grid axis 1 walks blocks of H. Per step we get
    # W1[:, kblk] and W2[kblk, :]; an f32 accumulator holds layer-2 pre-activation.
    k = pl.program_id(1)

    @pl.when(k == 0)
    def _():
        acc_ref[...] = jnp.zeros_like(acc_ref)

    h1 = jnp.dot(x_ref[...], w1_ref[...], preferred_element_type=jnp.float32)
    h1 = jnp.maximum(h1 + b1_ref[...], 0.0)
    acc_ref[...] += jnp.dot(h1.astype(w2_ref.dtype), w2_ref[...],
                            preferred_element_type=jnp.float32)

    @pl.when(k == pl.num_programs(1) - 1)
    def _():
        h2 = jnp.maximum(acc_ref[...] + b2_ref[...], 0.0)
        y = jnp.dot(h2.astype(w3_ref.dtype), w3_ref[...],
                    preferred_element_type=jnp.float32)
        o_ref[...] = (y + b3_ref[...]).astype(o_ref.dtype)


# -----------------------------------------------------------------------------
# Parameter padding (hoisted: do this ONCE per parameter set, not per call)
# -----------------------------------------------------------------------------
class MLPPaddedParams(NamedTuple):
    w1: jax.Array
    b1: jax.Array
    w2: jax.Array
    b2: jax.Array
    w3: jax.Array
    b3: jax.Array


def pad_mlp_params(w1, b1, w2, b2, w3, b3, *, compute_dtype=None):
    """Pad/cast MLP parameters once.

    Weights are (in_features, out_features) = transpose of PyTorch's layout.
    compute_dtype: matmul operand dtype; bfloat16 is the MXU fast path on ALL
    TPU generations (v5e/v6e/v7x) and halves weight/x bytes. Accumulation,
    bias-add and ReLU stay f32 inside the kernel regardless.
    """
    D, H = w1.shape
    assert w2.shape == (H, H) and w3.shape == (H, D)
    gen, _, _ = _hw_info()
    w_dtype = jnp.dtype(compute_dtype) if compute_dtype is not None else jnp.dtype(w1.dtype)

    Dp = _round_up(D, _LANE)
    # v6e/v7x MXU is 2x256x256: align the weight-resident hidden dim to 256 so no
    # layer ends in a half-width N chunk. D (HBM-streamed in/out) stays 128-aligned.
    hidden_align = 256 if gen >= 6 else 128
    Hp = _round_up(H, hidden_align)

    w1p = jnp.zeros((Dp, Hp), w_dtype).at[:D, :H].set(w1.astype(w_dtype))
    w2p = jnp.zeros((Hp, Hp), w_dtype).at[:H, :H].set(w2.astype(w_dtype))
    w3p = jnp.zeros((Hp, Dp), w_dtype).at[:H, :D].set(w3.astype(w_dtype))
    b1p = jnp.zeros((1, Hp), jnp.float32).at[0, :H].set(b1.astype(jnp.float32))
    b2p = jnp.zeros((1, Hp), jnp.float32).at[0, :H].set(b2.astype(jnp.float32))
    b3p = jnp.zeros((1, Dp), jnp.float32).at[0, :D].set(b3.astype(jnp.float32))

    params = MLPPaddedParams(w1p, b1p, w2p, b2p, w3p, b3p)
    meta = dict(D=D, H=H, Dp=Dp, Hp=Hp, w_dtype=w_dtype)
    return params, meta


# -----------------------------------------------------------------------------
# Forward
# -----------------------------------------------------------------------------
def mlp_forward_padded(x, params, *, D, H, Dp, Hp, w_dtype,
                       out_dtype=None, block_b=None,
                       force_hidden_tiling=False, hidden_block=None):
    """Run the fused MLP forward on pre-padded params.

    x: (B, D). Output: (B, D) in `out_dtype` (default x.dtype; pass bf16 to halve
    output writeback bytes). jit-friendly: all tiling decisions are static.
    """
    B = x.shape[0]
    assert x.shape[1] == D
    out_dtype = jnp.dtype(out_dtype) if out_dtype is not None else jnp.dtype(x.dtype)
    w_dtype = jnp.dtype(w_dtype)

    gen, vmem_bytes, num_tc = _hw_info()
    vmem_cap = int(vmem_bytes * 0.85)          # ~108 MiB v5e/v6e, ~54 MiB v7x
    w_item = w_dtype.itemsize
    x_item = w_item                            # x cast to the matmul operand dtype
    o_item = out_dtype.itemsize

    single_buf = _single_buffer_supported()
    wbuf = 1 if single_buf else 2              # weight VMEM buffering factor
    # bf16 packs 2 rows per sublane: keep batch tiles a multiple of 16 rows then.
    row_mult = 16 if w_item < 4 else 8

    # ---- path selection: fully VMEM-resident weights vs. hidden-dim tiling ----
    resident_weight_bytes = (Dp * Hp + Hp * Hp + Hp * Dp) * w_item * wbuf
    bias_bytes = (2 * Hp + Dp) * 4 * 2         # biases keep default double-buffering
    min_rows = 2 * row_mult
    min_io = 2 * min_rows * Dp * (x_item + o_item) + 2 * min_rows * Hp * 4
    use_resident = (not force_hidden_tiling) and (
        resident_weight_bytes + bias_bytes + min_io <= int(vmem_cap * 0.9))

    if use_resident:
        # ------------------ resident path: grid = (batch blocks,) ------------------
        fixed = resident_weight_bytes + bias_bytes
        per_row = 2 * Dp * (x_item + o_item) + 2 * Hp * 4
        max_rows = max(row_mult, (int(vmem_cap * 0.9) - fixed) // per_row)
        target = block_b if block_b is not None else 512
        bb = min(target, max_rows, 1024, _round_up(B, row_mult))
        if num_tc >= 2 and B >= 2 * row_mult:
            # Guarantee >= 2 grid steps so the parallel axis shards over both TCs.
            bb = min(bb, _round_up(_cdiv(B, 2), row_mult))
        bb = max(row_mult, (bb // row_mult) * row_mult)
        Bp = _round_up(B, bb)

        def wspec(r, c):
            if single_buf:
                return pl.BlockSpec((r, c), lambda i: (0, 0),
                                    pipeline_mode=pl.Buffered(1))
            return pl.BlockSpec((r, c), lambda i: (0, 0))

        in_specs = [
            pl.BlockSpec((bb, Dp), lambda i: (i, 0)),   # x (pipelined over batch)
            wspec(Dp, Hp),                              # W1 (VMEM-resident)
            pl.BlockSpec((1, Hp), lambda i: (0, 0)),    # b1
            wspec(Hp, Hp),                              # W2
            pl.BlockSpec((1, Hp), lambda i: (0, 0)),    # b2
            wspec(Hp, Dp),                              # W3
            pl.BlockSpec((1, Dp), lambda i: (0, 0)),    # b3
        ]
        out_specs = pl.BlockSpec((bb, Dp), lambda i: (i, 0))

        needed = (resident_weight_bytes + bias_bytes
                  + 2 * bb * Dp * (x_item + o_item) + 2 * bb * Hp * 4)
        vmem_limit = int(min(vmem_cap, max(int(needed * 1.25), 16 << 20)))

        flops = 2 * Bp * (Dp * Hp + Hp * Hp + Hp * Dp)
        bytes_accessed = (Bp * Dp * (x_item + o_item)
                          + (Dp * Hp + Hp * Hp + Hp * Dp) * w_item
                          + (2 * Hp + Dp) * 4)

        call = pl.pallas_call(
            _mlp_kernel_resident,
            out_shape=jax.ShapeDtypeStruct((Bp, Dp), out_dtype),
            grid_spec=pltpu.PrefetchScalarGridSpec(
                num_scalar_prefetch=0, grid=(Bp // bb,),
                in_specs=in_specs, out_specs=out_specs),
            compiler_params=pltpu.CompilerParams(
                dimension_semantics=("parallel",),
                vmem_limit_bytes=vmem_limit),
            cost_estimate=pl.CostEstimate(
                flops=flops, transcendentals=0, bytes_accessed=bytes_accessed),
        )
    else:
        # -------- hidden-dim tiled path: grid = (batch blocks, H blocks) ----------
        # TODO(synk): W3 (Hp x Dp) stays VMEM-resident even on this path; tile it too
        # if both H and D are very large.
        resident_bytes = Hp * Dp * w_item * wbuf + (Hp + Dp) * 4 * 2
        per_row = 2 * Dp * (x_item + o_item) + 2 * Hp * 4   # io dbuf + acc + live h2
        budget = int(vmem_cap * 0.85)
        max_rows = max(row_mult, (budget - resident_bytes) // max(per_row, 1))
        target = block_b if block_b is not None else 256
        bb = min(target, max_rows, 512, _round_up(B, row_mult))
        if num_tc >= 2 and B >= 2 * row_mult:
            bb = min(bb, _round_up(_cdiv(B, 2), row_mult))
        bb = max(row_mult, (bb // row_mult) * row_mult)
        Bp = _round_up(B, bb)

        # Hidden tile: multiple of 128 dividing Hp, sized so the streamed
        # (double-buffered) W1-column / W2-row blocks fit the remaining budget.
        left = budget - resident_bytes - bb * Hp * 4 - 2 * bb * Dp * (x_item + o_item)
        per_th = 2 * (Dp + Hp) * w_item + 2 * 4
        th_cap = max(128, min(Hp, 1024, (left // max(per_th, 1)) // 128 * 128))
        if hidden_block is not None:
            th_cap = min(th_cap, max(128, (hidden_block // 128) * 128))
        th = 128
        cand = 128
        while cand <= th_cap:
            if Hp % cand == 0:
                th = cand
            cand += 128
        nk = Hp // th

        def w3spec():
            if single_buf:
                return pl.BlockSpec((Hp, Dp), lambda i, k: (0, 0),
                                    pipeline_mode=pl.Buffered(1))
            return pl.BlockSpec((Hp, Dp), lambda i, k: (0, 0))

        in_specs = [
            pl.BlockSpec((bb, Dp), lambda i, k: (i, 0)),   # x (held across k)
            pl.BlockSpec((Dp, th), lambda i, k: (0, k)),   # W1 column block (streamed)
            pl.BlockSpec((1, th), lambda i, k: (0, k)),    # b1 block
            pl.BlockSpec((th, Hp), lambda i, k: (k, 0)),   # W2 row block (streamed)
            pl.BlockSpec((1, Hp), lambda i, k: (0, 0)),    # b2 (resident)
            w3spec(),                                      # W3 (resident)
            pl.BlockSpec((1, Dp), lambda i, k: (0, 0)),    # b3
        ]
        out_specs = pl.BlockSpec((bb, Dp), lambda i, k: (i, 0))

        needed = (resident_bytes + bb * Hp * 4
                  + 2 * bb * Dp * (x_item + o_item)
                  + 2 * (Dp * th + th * Hp) * w_item + 2 * th * 4)
        vmem_limit = int(min(vmem_cap, max(int(needed * 1.25), 16 << 20)))

        flops = 2 * Bp * (Dp * Hp + Hp * Hp + Hp * Dp)
        bytes_accessed = (Bp * Dp * (x_item + o_item)
                          + (Bp // bb) * (Dp * Hp + Hp * Hp) * w_item
                          + Hp * Dp * w_item + (2 * Hp + Dp) * 4)

        call = pl.pallas_call(
            _mlp_kernel_htiled,
            out_shape=jax.ShapeDtypeStruct((Bp, Dp), out_dtype),
            grid_spec=pltpu.PrefetchScalarGridSpec(
                num_scalar_prefetch=0, grid=(Bp // bb, nk),
                in_specs=in_specs, out_specs=out_specs,
                scratch_shapes=[pltpu.VMEM((bb, Hp), jnp.float32)]),
            compiler_params=pltpu.CompilerParams(
                dimension_semantics=("parallel", "arbitrary"),
                vmem_limit_bytes=vmem_limit),
            cost_estimate=pl.CostEstimate(
                flops=flops, transcendentals=0, bytes_accessed=bytes_accessed),
        )

    # x padding only when actually needed (skipped for aligned serving shapes).
    xp = x.astype(w_dtype)
    if Bp != B or Dp != D:
        xp = jnp.zeros((Bp, Dp), w_dtype).at[:B, :D].set(xp)

    out = call(xp, *params)
    if Bp != B or Dp != D:
        out = out[:B, :D]
    return out


def mlp_forward(x, w1, b1, w2, b2, w3, b3, *, compute_dtype=None, **kwargs):
    """Convenience one-shot wrapper (pads params per call; prefer pad_mlp_params +
    mlp_forward_padded under jit for repeated calls)."""
    params, meta = pad_mlp_params(w1, b1, w2, b2, w3, b3, compute_dtype=compute_dtype)
    return mlp_forward_padded(x, params, **meta, **kwargs)


def init_mlp_params(key, data_dim, hidden_dim, dtype=jnp.float32):
    """Deterministic init mimicking PyTorch nn.Linear default (uniform +/- 1/sqrt(fan_in))."""
    ks = jax.random.split(key, 6)

    def linear_init(kw, kb, fan_in, fan_out):
        bound = 1.0 / jnp.sqrt(jnp.asarray(fan_in, dtype=jnp.float32))
        # Stored as (in, out): transpose of PyTorch's (out, in) weight.
        w = jax.random.uniform(kw, (fan_in, fan_out), dtype, -bound, bound)
        b = jax.random.uniform(kb, (fan_out,), dtype, -bound, bound)
        return w, b

    w1, b1 = linear_init(ks[0], ks[1], data_dim, hidden_dim)
    w2, b2 = linear_init(ks[2], ks[3], hidden_dim, hidden_dim)
    w3, b3 = linear_init(ks[4], ks[5], hidden_dim, data_dim)
    return w1, b1, w2, b2, w3, b3


if __name__ == "__main__":
    key = jax.random.PRNGKey(0)
    k_x, k_p, k_x2, k_p2 = jax.random.split(key, 4)

    def ref_mlp(x, w1, b1, w2, b2, w3, b3):
        h = jnp.maximum(x @ w1 + b1, 0.0)
        h = jnp.maximum(h @ w2 + b2, 0.0)
        return h @ w3 + b3

    # Small demo shapes consistent with MLP(data_dim=16, hidden_dim=64).
    batch, data_dim, hidden_dim = 8, 16, 64
    x = jax.random.normal(k_x, (batch, data_dim), dtype=jnp.float32)
    w1, b1, w2, b2, w3, b3 = init_mlp_params(k_p, data_dim, hidden_dim)
    ref = ref_mlp(x, w1, b1, w2, b2, w3, b3)

    # --- f32 path: pad params once, jit the per-call forward. -------------------
    params_f32, meta_f32 = pad_mlp_params(w1, b1, w2, b2, w3, b3)
    fwd_f32 = jax.jit(functools.partial(mlp_forward_padded, **meta_f32))
    out_f32 = jax.block_until_ready(fwd_f32(x, params_f32))
    assert out_f32.shape == (batch, data_dim)
    assert jnp.allclose(out_f32, ref, atol=1e-5, rtol=1e-5)

    # --- bf16 MXU-operand path (fast path on v5e/v6e/v7x); f32 accumulation. ----
    params_bf16, meta_bf16 = pad_mlp_params(w1, b1, w2, b2, w3, b3,
                                            compute_dtype=jnp.bfloat16)
    fwd_bf16 = jax.jit(functools.partial(mlp_forward_padded, **meta_bf16))
    out_bf16 = jax.block_until_ready(fwd_bf16(x, params_bf16))
    assert out_bf16.shape == (batch, data_dim)
    assert jnp.allclose(out_bf16, ref, atol=5e-2, rtol=5e-2)

    # --- exercise the hidden-dim tiled fallback (auto-selected for large H);
    #     forced here at small shapes (2 hidden blocks) to verify correctness. ----
    b2_, d2_, h2_ = 64, 32, 256
    x2 = jax.random.normal(k_x2, (b2_, d2_), dtype=jnp.float32)
    p2 = init_mlp_params(k_p2, d2_, h2_)
    ref2 = ref_mlp(x2, *p2)
    params2, meta2 = pad_mlp_params(*p2)
    fwd_tiled = jax.jit(functools.partial(mlp_forward_padded, **meta2,
                                          force_hidden_tiling=True, hidden_block=128))
    out2 = jax.block_until_ready(fwd_tiled(x2, params2))
    assert out2.shape == (b2_, d2_)
    assert jnp.allclose(out2, ref2, atol=1e-3, rtol=1e-3)

    print("KERNEL_OK")
</pallas_src>

<mosaic_0001>
module attributes {stable_mosaic.version = 11 : i64} {
  func.func @_mlp_kernel_resident(%arg0: i32, %arg1: memref<8x128xf32, #tpu.memory_space<vmem>>, %arg2: memref<128x256xf32, #tpu.memory_space<vmem>>, %arg3: memref<1x256xf32, #tpu.memory_space<vmem>>, %arg4: memref<256x256xf32, #tpu.memory_space<vmem>>, %arg5: memref<1x256xf32, #tpu.memory_space<vmem>>, %arg6: memref<256x128xf32, #tpu.memory_space<vmem>>, %arg7: memref<1x128xf32, #tpu.memory_space<vmem>>, %arg8: memref<8x128xf32, #tpu.memory_space<vmem>>) attributes {dimension_semantics = [#tpu.dimension_semantics<parallel>], iteration_bounds = array<i64: 1>, scalar_prefetch = 0 : i64, scratch_operands = 0 : i64, tpu.core_type = #tpu.core_type<tc>, window_params = [{transform_indices = @transform_0, window_bounds = array<i64: 8, 128>}, {pipeline_mode = #tpu.pipeline_mode<synchronous>, transform_indices = @transform_1, window_bounds = array<i64: 128, 256>}, {pipeline_mode = #tpu.pipeline_mode<synchronous>, transform_indices = @transform_2, window_bounds = array<i64: 1, 256>}, {pipeline_mode = #tpu.pipeline_mode<synchronous>, transform_indices = @transform_3, window_bounds = array<i64: 256, 256>}, {pipeline_mode = #tpu.pipeline_mode<synchronous>, transform_indices = @transform_4, window_bounds = array<i64: 1, 256>}, {pipeline_mode = #tpu.pipeline_mode<synchronous>, transform_indices = @transform_5, window_bounds = array<i64: 256, 128>}, {pipeline_mode = #tpu.pipeline_mode<synchronous>, transform_indices = @transform_6, window_bounds = array<i64: 1, 128>}, {transform_indices = @transform_7, window_bounds = array<i64: 8, 128>}]} {
    %c0 = arith.constant 0 : index
    %c0_0 = arith.constant 0 : index
    %0 = vector.load %arg1[%c0, %c0_0] : memref<8x128xf32, #tpu.memory_space<vmem>>, vector<8x128xf32>
    %c0_1 = arith.constant 0 : index
    %c0_2 = arith.constant 0 : index
    %1 = vector.load %arg2[%c0_1, %c0_2] : memref<128x256xf32, #tpu.memory_space<vmem>>, vector<128x256xf32>
    %cst = arith.constant dense<0.000000e+00> : vector<8x256xf32>
    %2 = tpu.matmul %0, %1, %cst {dimension_numbers = #tpu.dot_dimension_numbers<[1], [0], [0], [1], [0, 0, 1, 1], [], []>} : vector<8x128xf32>, vector<128x256xf32>, vector<8x256xf32> -> vector<8x256xf32>
    %c0_3 = arith.constant 0 : index
    %c0_4 = arith.constant 0 : index
    %3 = vector.load %arg3[%c0_3, %c0_4] : memref<1x256xf32, #tpu.memory_space<vmem>>, vector<1x256xf32>
    %4 = vector.broadcast %3 : vector<1x256xf32> to vector<8x256xf32>
    %5 = arith.addf %2, %4 : vector<8x256xf32>
    %cst_5 = arith.constant 0.000000e+00 : f32
    %6 = vector.broadcast %cst_5 : f32 to vector<8x256xf32>
    %7 = arith.maximumf %5, %6 : vector<8x256xf32>
    %c0_6 = arith.constant 0 : index
    %c0_7 = arith.constant 0 : index
    %8 = vector.load %arg4[%c0_6, %c0_7] : memref<256x256xf32, #tpu.memory_space<vmem>>, vector<256x256xf32>
    %cst_8 = arith.constant dense<0.000000e+00> : vector<8x256xf32>
    %9 = tpu.matmul %7, %8, %cst_8 {dimension_numbers = #tpu.dot_dimension_numbers<[1], [0], [0], [1], [0, 0, 1, 1], [], []>} : vector<8x256xf32>, vector<256x256xf32>, vector<8x256xf32> -> vector<8x256xf32>
    %c0_9 = arith.constant 0 : index
    %c0_10 = arith.constant 0 : index
    %10 = vector.load %arg5[%c0_9, %c0_10] : memref<1x256xf32, #tpu.memory_space<vmem>>, vector<1x256xf32>
    %11 = vector.broadcast %10 : vector<1x256xf32> to vector<8x256xf32>
    %12 = arith.addf %9, %11 : vector<8x256xf32>
    %cst_11 = arith.constant 0.000000e+00 : f32
    %13 = vector.broadcast %cst_11 : f32 to vector<8x256xf32>
    %14 = arith.maximumf %12, %13 : vector<8x256xf32>
    %c0_12 = arith.constant 0 : index
    %c0_13 = arith.constant 0 : index
    %15 = vector.load %arg6[%c0_12, %c0_13] : memref<256x128xf32, #tpu.memory_space<vmem>>, vector<256x128xf32>
    %cst_14 = arith.constant dense<0.000000e+00> : vector<8x128xf32>
    %16 = tpu.matmul %14, %15, %cst_14 {dimension_numbers = #tpu.dot_dimension_numbers<[1], [0], [0], [1], [0, 0, 1, 1], [], []>} : vector<8x256xf32>, vector<256x128xf32>, vector<8x128xf32> -> vector<8x128xf32>
    %c0_15 = arith.constant 0 : index
    %c0_16 = arith.constant 0 : index
    %17 = vector.load %arg7[%c0_15, %c0_16] : memref<1x128xf32, #tpu.memory_space<vmem>>, vector<1x128xf32>
    %18 = vector.broadcast %17 : vector<1x128xf32> to vector<8x128xf32>
    %19 = arith.addf %16, %18 : vector<8x128xf32>
    %c0_17 = arith.constant 0 : index
    %c0_18 = arith.constant 0 : index
    %20 = vector.load %arg8[%c0_17, %c0_18] : memref<8x128xf32, #tpu.memory_space<vmem>>, vector<8x128xf32>
    tpu.vector_store %arg8[%c0_17, %c0_18], %19 {strides = array<i32>} : memref<8x128xf32, #tpu.memory_space<vmem>>, vector<8x128xf32>,
    return
  }
  func.func @transform_0(%arg0: i32) -> (i32, i32) {
    %c0_i32 = arith.constant 0 : i32
    %c0_i32_0 = arith.constant 0 : i32
    return %arg0, %c0_i32 : i32, i32
  }
  func.func @transform_1(%arg0: i32) -> (i32, i32) {
    %c0_i32 = arith.constant 0 : i32
    %c0_i32_0 = arith.constant 0 : i32
    %c0_i32_1 = arith.constant 0 : i32
    return %c0_i32, %c0_i32_0 : i32, i32
  }
  func.func @transform_2(%arg0: i32) -> (i32, i32) {
    %c0_i32 = arith.constant 0 : i32
    %c0_i32_0 = arith.constant 0 : i32
    %c0_i32_1 = arith.constant 0 : i32
    return %c0_i32, %c0_i32_0 : i32, i32
  }
  func.func @transform_3(%arg0: i32) -> (i32, i32) {
    %c0_i32 = arith.constant 0 : i32
    %c0_i32_0 = arith.constant 0 : i32
    %c0_i32_1 = arith.constant 0 : i32
    return %c0_i32, %c0_i32_0 : i32, i32
  }
  func.func @transform_4(%arg0: i32) -> (i32, i32) {
    %c0_i32 = arith.constant 0 : i32
    %c0_i32_0 = arith.constant 0 : i32
    %c0_i32_1 = arith.constant 0 : i32
    return %c0_i32, %c0_i32_0 : i32, i32
  }
  func.func @transform_5(%arg0: i32) -> (i32, i32) {
    %c0_i32 = arith.constant 0 : i32
    %c0_i32_0 = arith.constant 0 : i32
    %c0_i32_1 = arith.constant 0 : i32
    return %c0_i32, %c0_i32_0 : i32, i32
  }
  func.func @transform_6(%arg0: i32) -> (i32, i32) {
    %c0_i32 = arith.constant 0 : i32
    %c0_i32_0 = arith.constant 0 : i32
    %c0_i32_1 = arith.constant 0 : i32
    return %c0_i32, %c0_i32_0 : i32, i32
  }
  func.func @transform_7(%arg0: i32) -> (i32, i32) {
    %c0_i32 = arith.constant 0 : i32
    %c0_i32_0 = arith.constant 0 : i32
    return %arg0, %c0_i32 : i32, i32
  }
}

</mosaic_0001>

<llo_original>
// kernel: mlp_forward_padded.1
$region0: #{mlp_forward_padded.1}
  #allocation0 [shape = 'u32[]', space=smem, size = 0x4, offset = 0x4, fixed_abs, tag = 'smem constant byte address 0x4 - core index']
  #allocation1 [shape = 'u32[144,128]{1,0:T(1,128)}', space=vmem, size = 0x12000, scoped, tag = 'internal scratch']
  %s0 = inlined_call_operand.vmem [shape: f32[8,128], index: 0, kind: input, shape index: {}]
  %s1 = inlined_call_operand.hbm [shape: f32[128,256], index: 1, kind: input, shape index: {}]
  %s2 = inlined_call_operand.vmem [shape: f32[1,256], index: 2, kind: input, shape index: {}]
  %s3 = inlined_call_operand.hbm [shape: f32[256,256], index: 3, kind: input, shape index: {}]
  %s4 = inlined_call_operand.vmem [shape: f32[1,256], index: 4, kind: input, shape index: {}]
  %s5 = inlined_call_operand.hbm [shape: f32[256,128], index: 5, kind: input, shape index: {}]
  %s6 = inlined_call_operand.vmem [shape: f32[1,128], index: 6, kind: input, shape index: {}]
  %s7 = inlined_call_operand.hbm [shape: f32[8,128], index: 7, kind: output, shape index: {}]
  %s8 = sld [smem:[#allocation0]]
  $region50: #{mlp_forward_padded.1} parent=0
    _
  %s10 = ssub.s32 1, %s8
  %s11 = scalar_select 0, %s10, %s8
  $region1: #{mlp_forward_padded.1} parent=0
    #allocation2 [shape = 'u8[131072]{0}', space=vmem, size = 0x20000, scoped, tag = 'input window, operand 1, single buffered']
    #allocation3 [shape = 's32[1]{0}', space=sflag, size = 0x4, scoped, tag = 'scoped memory for mlp_forward_padded.1']
    #allocation4 [shape = 's32[1]{0}', space=sflag, size = 0x4, scoped, tag = 'scoped memory for mlp_forward_padded.1']
    #allocation5 [shape = 'u8[262144]{0}', space=vmem, size = 0x40000, scoped, tag = 'input window, operand 3, single buffered']
    #allocation6 [shape = 's32[1]{0}', space=sflag, size = 0x4, scoped, tag = 'scoped memory for mlp_forward_padded.1']
    #allocation7 [shape = 'u8[131072]{0}', space=vmem, size = 0x20000, scoped, tag = 'input window, operand 5, single buffered']
    #allocation8 [shape = 'u8[4096]{0}', space=vmem, size = 0x1000, scoped, tag = 'output window, operand 0, single buffered']
    %12 = vsyncpa [#allocation3], 0
    %13 = vsyncpa [#allocation6], 0
    %14 = vsyncpa [#allocation4], 0
    // Predicated region
    $region2: #{mlp_forward_padded.1} parent=1 // pred_check
      _
    $region3: #{mlp_forward_padded.1} parent=1 // pred_check_branch
      %16 = sbr.rel (0) target = $region5
    $region4: #{mlp_forward_padded.1} parent=1 // pred_region
      _
    $region5: #{mlp_forward_padded.1} parent=1 // pred_fallthru
      _
    // Predicated region
    $region6: #{mlp_forward_padded.1} parent=1 // pred_check
      _
    $region7: #{mlp_forward_padded.1} parent=1 // pred_check_branch
      %18 = sbr.rel (0) target = $region9
    $region8: #{mlp_forward_padded.1} parent=1 // pred_region
      %s20 = ssub.s32 4096, 4096
      %21 = vsyncadd [#allocation3], %s20
      %s22 = sshll.u32 [#allocation2], 4
      %s23 = int_to_ptr.vmem [resolvable:$true] %s22
      %28 = dma.hbm_to_vmem [thread:$0]  %s1, 4096, %s23, [#allocation3], 256, 256, 16
    $region9: #{mlp_forward_padded.1} parent=1 // pred_fallthru
      _
    // Predicated region
    $region10: #{mlp_forward_padded.1} parent=1 // pred_check
      _
    $region11: #{mlp_forward_padded.1} parent=1 // pred_check_branch
      %30 = sbr.rel (0) target = $region13
    $region12: #{mlp_forward_padded.1} parent=1 // pred_region
      _
    $region13: #{mlp_forward_padded.1} parent=1 // pred_fallthru
      _
    // Predicated region
    $region14: #{mlp_forward_padded.1} parent=1 // pred_check
      _
    $region15: #{mlp_forward_padded.1} parent=1 // pred_check_branch
      %32 = sbr.rel (0) target = $region17
    $region16: #{mlp_forward_padded.1} parent=1 // pred_region
      %s34 = ssub.s32 8192, 8192
      %35 = vsyncadd [#allocation6], %s34
      %s36 = sshll.u32 [#allocation5], 4
      %s37 = int_to_ptr.vmem [resolvable:$true] %s36
      %42 = dma.hbm_to_vmem [thread:$0]  %s3, 8192, %s37, [#allocation6], 256, 256, 16
    $region17: #{mlp_forward_padded.1} parent=1 // pred_fallthru
      _
    // Predicated region
    $region18: #{mlp_forward_padded.1} parent=1 // pred_check
      _
    $region19: #{mlp_forward_padded.1} parent=1 // pred_check_branch
      %44 = sbr.rel (0) target = $region21
    $region20: #{mlp_forward_padded.1} parent=1 // pred_region
      _
    $region21: #{mlp_forward_padded.1} parent=1 // pred_fallthru
      _
    // Predicated region
    $region22: #{mlp_forward_padded.1} parent=1 // pred_check
      _
    $region23: #{mlp_forward_padded.1} parent=1 // pred_check_branch
      %46 = sbr.rel (0) target = $region25
    $region24: #{mlp_forward_padded.1} parent=1 // pred_region
      %s48 = ssub.s32 4096, 4096
      %49 = vsyncadd [#allocation6], %s48
      %s50 = sshll.u32 [#allocation7], 4
      %s51 = int_to_ptr.vmem [resolvable:$true] %s50
      %56 = dma.hbm_to_vmem [thread:$0]  %s5, 4096, %s51, [#allocation6], 128, 128, 8
    $region25: #{mlp_forward_padded.1} parent=1 // pred_fallthru
      _
    // Predicated region
    $region26: #{mlp_forward_padded.1} parent=1 // pred_check
      _
    $region27: #{mlp_forward_padded.1} parent=1 // pred_check_branch
      %58 = sbr.rel (0) target = $region29
    $region28: #{mlp_forward_padded.1} parent=1 // pred_region
      _
    $region29: #{mlp_forward_padded.1} parent=1 // pred_fallthru
      _
    // Predicated region
    $region30: #{mlp_forward_padded.1} parent=1 // pred_check
      _
    $region31: #{mlp_forward_padded.1} parent=1 // pred_check_branch
      %60 = sbr.rel (0) target = $region33
    $region32: #{mlp_forward_padded.1} parent=1 // pred_region
      %61 = dma.done [#allocation3], 4096
    $region33: #{mlp_forward_padded.1} parent=1 // pred_fallthru
      _
    // Predicated region
    $region34: #{mlp_forward_padded.1} parent=1 // pred_check
      _
    $region35: #{mlp_forward_padded.1} parent=1 // pred_check_branch
      %63 = sbr.rel (0) target = $region37
    $region36: #{mlp_forward_padded.1} parent=1 // pred_region
      %64 = dma.done [#allocation6], 8192
    $region37: #{mlp_forward_padded.1} parent=1 // pred_fallthru
      _
    // Predicated region
    $region38: #{mlp_forward_padded.1} parent=1 // pred_check
      _
    $region39: #{mlp_forward_padded.1} parent=1 // pred_check_branch
      %66 = sbr.rel (0) target = $region41
    $region40: #{mlp_forward_padded.1} parent=1 // pred_region
      %67 = dma.done [#allocation6], 4096
    $region41: #{mlp_forward_padded.1} parent=1 // pred_fallthru
      _
    %v68 = vld [vmem:[%s0] sm:$0xff]
    %v69 = vld [vmem:[#allocation2] sm:$0xff]
    %v70 = vld [vmem:[#allocation2 + $0x8] sm:$0xff]
    %v71 = vld [vmem:[#allocation2 + $0x10] sm:$0xff]
    %v72 = vld [vmem:[#allocation2 + $0x18] sm:$0xff]
    %v73 = vld [vmem:[#allocation2 + $0x20] sm:$0xff]
    %v74 = vld [vmem:[#allocation2 + $0x28] sm:$0xff]
    %v75 = vld [vmem:[#allocation2 + $0x30] sm:$0xff]
    %v76 = vld [vmem:[#allocation2 + $0x38] sm:$0xff]
    %v77 = vld [vmem:[#allocation2 + $0x40] sm:$0xff]
    %v78 = vld [vmem:[#allocation2 + $0x48] sm:$0xff]
    %v79 = vld [vmem:[#allocation2 + $0x50] sm:$0xff]
    %v80 = vld [vmem:[#allocation2 + $0x58] sm:$0xff]
    %v81 = vld [vmem:[#allocation2 + $0x60] sm:$0xff]
    %v82 = vld [vmem:[#allocation2 + $0x68] sm:$0xff]
    %v83 = vld [vmem:[#allocation2 + $0x70] sm:$0xff]
    %v84 = vld [vmem:[#allocation2 + $0x78] sm:$0xff]
    %v85 = vld [vmem:[#allocation2 + $0x80] sm:$0xff]
    %v86 = vld [vmem:[#allocation2 + $0x88] sm:$0xff]
    %v87 = vld [vmem:[#allocation2 + $0x90] sm:$0xff]
    %v88 = vld [vmem:[#allocation2 + $0x98] sm:$0xff]
    %v89 = vld [vmem:[#allocation2 + $0xa0] sm:$0xff]
    %v90 = vld [vmem:[#allocation2 + $0xa8] sm:$0xff]
    %v91 = vld [vmem:[#allocation2 + $0xb0] sm:$0xff]
    %v92 = vld [vmem:[#allocation2 + $0xb8] sm:$0xff]
    %v93 = vld [vmem:[#allocation2 + $0xc0] sm:$0xff]
    %v94 = vld [vmem:[#allocation2 + $0xc8] sm:$0xff]
    %v95 = vld [vmem:[#allocation2 + $0xd0] sm:$0xff]
    %v96 = vld [vmem:[#allocation2 + $0xd8] sm:$0xff]
    %v97 = vld [vmem:[#allocation2 + $0xe0] sm:$0xff]
    %v98 = vld [vmem:[#allocation2 + $0xe8] sm:$0xff]
    %v99 = vld [vmem:[#allocation2 + $0xf0] sm:$0xff]
    %v100 = vld [vmem:[#allocation2 + $0xf8] sm:$0xff]
    %v101 = vld [vmem:[%s2] sm:$0x3]
    %v103 = vlaneseq
    %v104 = vshrl.u32 %v103, 7
    %v105 = vsub.s32 0, %v104
    %v106 = vrot.slane %v101, %v105
    %v107 = vlaneseq
    %v108 = vshrl.u32 %v107, 7
    %v109 = vsub.s32 1, %v108
    %v110 = vrot.slane %v101, %v109
    %113 = vmatprep.subr.mxu0 %v100
    %114 = vmatpush1.msra.mxu0 %v99
    %115 = vmatprep.subr.mxu0 %v98
    %116 = vmatpush1.msra.mxu0 %v97
    %117 = vmatprep.subr.mxu0 %v96
    %118 = vmatpush1.msra.mxu0 %v95
    %119 = vmatprep.subr.mxu0 %v94
    %120 = vmatpush1.msra.mxu0 %v93
    %121 = vmatprep.subr.mxu0 %v92
    %122 = vmatpush1.msra.mxu0 %v91
    %123 = vmatprep.subr.mxu0 %v90
    %124 = vmatpush1.msra.mxu0 %v89
    %125 = vmatprep.subr.mxu0 %v88
    %126 = vmatpush1.msra.mxu0 %v87
    %127 = vmatprep.subr.mxu0 %v86
    %128 = vmatpush1.msra.mxu0 %v85
    %129 = vmatprep.subr.mxu0 %v84
    %130 = vmatpush1.msra.mxu0 %v83
    %131 = vmatprep.subr.mxu0 %v82
    %132 = vmatpush1.msra.mxu0 %v81
    %133 = vmatprep.subr.mxu0 %v80
    %134 = vmatpush1.msra.mxu0 %v79
    %135 = vmatprep.subr.mxu0 %v78
    %136 = vmatpush1.msra.mxu0 %v77
    %137 = vmatprep.subr.mxu0 %v76
    %138 = vmatpush1.msra.mxu0 %v75
    %139 = vmatprep.subr.mxu0 %v74
    %140 = vmatpush1.msra.mxu0 %v73
    %141 = vmatprep.subr.mxu0 %v72
    %142 = vmatpush1.msra.mxu0 %v71
    %143 = vmatprep.subr.mxu0 %v70
    %144 = vmatpush1.msra.mxu0 %v69
    %145 = vmatprep.subr.mxu0 0.0
    %146 = vmatpush2.msra.mxu0 0.0
    %147 = vmatprep.subr.mxu0 0.0
    %148 = vmatpush2.msra.mxu0 0.0
    %149 = vmatprep.subr.mxu0 0.0
    %150 = vmatpush2.msra.mxu0 0.0
    %151 = vmatprep.subr.mxu0 0.0
    %152 = vmatpush2.msra.mxu0 0.0
    %153 = vmatprep.subr.mxu0 0.0
    %154 = vmatpush2.msra.mxu0 0.0
    %155 = vmatprep.subr.mxu0 0.0
    %156 = vmatpush2.msra.mxu0 0.0
    %157 = vmatprep.subr.mxu0 0.0
    %158 = vmatpush2.msra.mxu0 0.0
    %159 = vmatprep.subr.mxu0 0.0
    %160 = vmatpush2.msra.mxu0 0.0
    %161 = vmatprep.subr.mxu0 0.0
    %162 = vmatpush2.msra.mxu0 0.0
    %163 = vmatprep.subr.mxu0 0.0
    %164 = vmatpush2.msra.mxu0 0.0
    %165 = vmatprep.subr.mxu0 0.0
    %166 = vmatpush2.msra.mxu0 0.0
    %167 = vmatprep.subr.mxu0 0.0
    %168 = vmatpush2.msra.mxu0 0.0
    %169 = vmatprep.subr.mxu0 0.0
    %170 = vmatpush2.msra.mxu0 0.0
    %171 = vmatprep.subr.mxu0 0.0
    %172 = vmatpush2.msra.mxu0 0.0
    %173 = vmatprep.subr.mxu0 0.0
    %174 = vmatpush2.msra.mxu0 0.0
    %175 = vmatprep.subr.mxu0 0.0
    %176 = vmatpush2.msra.mxu0 0.0
    %177 = vmatprep.mubr.f32.mxu0 0.0
    %178 = vmatmul.mubr.f32.gmra.mxu0 %v68
    %v179 = vpop.f32.mrf.mxu0
    %v180 = vadd.f32 %v106, %v179
    %v181 = vpop.f32.mrf.mxu0
    %v182 = vadd.f32 %v110, %v181
    %183 = vdwg.mxu0
    %v184 = vmax.f32 %v180, 0.0
    %v185 = vmax.f32 %v182, 0.0
    %v186 = vld [vmem:[#allocation5] sm:$0xff]
    %v187 = vld [vmem:[#allocation5 + $0x8] sm:$0xff]
    %v188 = vld [vmem:[#allocation5 + $0x10] sm:$0xff]
    %v189 = vld [vmem:[#allocation5 + $0x18] sm:$0xff]
    %v190 = vld [vmem:[#allocation5 + $0x20] sm:$0xff]
    %v191 = vld [vmem:[#allocation5 + $0x28] sm:$0xff]
    %v192 = vld [vmem:[#allocation5 + $0x30] sm:$0xff]
    %v193 = vld [vmem:[#allocation5 + $0x38] sm:$0xff]
    %v194 = vld [vmem:[#allocation5 + $0x40] sm:$0xff]
    %v195 = vld [vmem:[#allocation5 + $0x48] sm:$0xff]
    %v196 = vld [vmem:[#allocation5 + $0x50] sm:$0xff]
    %v197 = vld [vmem:[#allocation5 + $0x58] sm:$0xff]
    %v198 = vld [vmem:[#allocation5 + $0x60] sm:$0xff]
    %v199 = vld [vmem:[#allocation5 + $0x68] sm:$0xff]
    %v200 = vld [vmem:[#allocation5 + $0x70] sm:$0xff]
    %v201 = vld [vmem:[#allocation5 + $0x78] sm:$0xff]
    %v202 = vld [vmem:[#allocation5 + $0x80] sm:$0xff]
    %v203 = vld [vmem:[#allocation5 + $0x88] sm:$0xff]
    %v204 = vld [vmem:[#allocation5 + $0x90] sm:$0xff]
    %v205 = vld [vmem:[#allocation5 + $0x98] sm:$0xff]
    %v206 = vld [vmem:[#allocation5 + $0xa0] sm:$0xff]
    %v207 = vld [vmem:[#allocation5 + $0xa8] sm:$0xff]
    %v208 = vld [vmem:[#allocation5 + $0xb0] sm:$0xff]
    %v209 = vld [vmem:[#allocation5 + $0xb8] sm:$0xff]
    %v210 = vld [vmem:[#allocation5 + $0xc0] sm:$0xff]
    %v211 = vld [vmem:[#allocation5 + $0xc8] sm:$0xff]
    %v212 = vld [vmem:[#allocation5 + $0xd0] sm:$0xff]
    %v213 = vld [vmem:[#allocation5 + $0xd8] sm:$0xff]
    %v214 = vld [vmem:[#allocation5 + $0xe0] sm:$0xff]
    %v215 = vld [vmem:[#allocation5 + $0xe8] sm:$0xff]
    %v216 = vld [vmem:[#allocation5 + $0xf0] sm:$0xff]
    %v217 = vld [vmem:[#allocation5 + $0xf8] sm:$0xff]
    %v218 = vld [vmem:[#allocation5 + $0x100] sm:$0xff]
    %v219 = vld [vmem:[#allocation5 + $0x108] sm:$0xff]
    %v220 = vld [vmem:[#allocation5 + $0x110] sm:$0xff]
    %v221 = vld [vmem:[#allocation5 + $0x118] sm:$0xff]
    %v222 = vld [vmem:[#allocation5 + $0x120] sm:$0xff]
    %v223 = vld [vmem:[#allocation5 + $0x128] sm:$0xff]
    %v224 = vld [vmem:[#allocation5 + $0x130] sm:$0xff]
    %v225 = vld [vmem:[#allocation5 + $0x138] sm:$0xff]
    %v226 = vld [vmem:[#allocation5 + $0x140] sm:$0xff]
    %v227 = vld [vmem:[#allocation5 + $0x148] sm:$0xff]
    %v228 = vld [vmem:[#allocation5 + $0x150] sm:$0xff]
    %v229 = vld [vmem:[#allocation5 + $0x158] sm:$0xff]
    %v230 = vld [vmem:[#allocation5 + $0x160] sm:$0xff]
    %v231 = vld [vmem:[#allocation5 + $0x168] sm:$0xff]
    %v232 = vld [vmem:[#allocation5 + $0x170] sm:$0xff]
    %v233 = vld [vmem:[#allocation5 + $0x178] sm:$0xff]
    %v234 = vld [vmem:[#allocation5 + $0x180] sm:$0xff]
    %v235 = vld [vmem:[#allocation5 + $0x188] sm:$0xff]
    %v236 = vld [vmem:[#allocation5 + $0x190] sm:$0xff]
    %v237 = vld [vmem:[#allocation5 + $0x198] sm:$0xff]
    %v238 = vld [vmem:[#allocation5 + $0x1a0] sm:$0xff]
    %v239 = vld [vmem:[#allocation5 + $0x1a8] sm:$0xff]
    %v240 = vld [vmem:[#allocation5 + $0x1b0] sm:$0xff]
    %v241 = vld [vmem:[#allocation5 + $0x1b8] sm:$0xff]
    %v242 = vld [vmem:[#allocation5 + $0x1c0] sm:$0xff]
    %v243 = vld [vmem:[#allocation5 + $0x1c8] sm:$0xff]
    %v244 = vld [vmem:[#allocation5 + $0x1d0] sm:$0xff]
    %v245 = vld [vmem:[#allocation5 + $0x1d8] sm:$0xff]
    %v246 = vld [vmem:[#allocation5 + $0x1e0] sm:$0xff]
    %v247 = vld [vmem:[#allocation5 + $0x1e8] sm:$0xff]
    %v248 = vld [vmem:[#allocation5 + $0x1f0] sm:$0xff]
    %v249 = vld [vmem:[#allocation5 + $0x1f8] sm:$0xff]
    %v250 = vld [vmem:[%s4] sm:$0x3]
    %v252 = vlaneseq
    %v253 = vshrl.u32 %v252, 7
    %v254 = vsub.s32 0, %v253
    %v255 = vrot.slane %v250, %v254
    %v256 = vlaneseq
    %v257 = vshrl.u32 %v256, 7
    %v258 = vsub.s32 1, %v257
    %v259 = vrot.slane %v250, %v258
    %262 = vmatprep.subr.mxu0 %v217
    %263 = vmatpush1.msra.mxu0 %v216
    %264 = vmatprep.subr.mxu0 %v215
    %265 = vmatpush1.msra.mxu0 %v214
    %266 = vmatprep.subr.mxu0 %v213
    %267 = vmatpush1.msra.mxu0 %v212
    %268 = vmatprep.subr.mxu0 %v211
    %269 = vmatpush1.msra.mxu0 %v210
    %270 = vmatprep.subr.mxu0 %v209
    %271 = vmatpush1.msra.mxu0 %v208
    %272 = vmatprep.subr.mxu0 %v207
    %273 = vmatpush1.msra.mxu0 %v206
    %274 = vmatprep.subr.mxu0 %v205
    %275 = vmatpush1.msra.mxu0 %v204
    %276 = vmatprep.subr.mxu0 %v203
    %277 = vmatpush1.msra.mxu0 %v202
    %278 = vmatprep.subr.mxu0 %v201
    %279 = vmatpush1.msra.mxu0 %v200
    %280 = vmatprep.subr.mxu0 %v199
    %281 = vmatpush1.msra.mxu0 %v198
    %282 = vmatprep.subr.mxu0 %v197
    %283 = vmatpush1.msra.mxu0 %v196
    %284 = vmatprep.subr.mxu0 %v195
    %285 = vmatpush1.msra.mxu0 %v194
    %286 = vmatprep.subr.mxu0 %v193
    %287 = vmatpush1.msra.mxu0 %v192
    %288 = vmatprep.subr.mxu0 %v191
    %289 = vmatpush1.msra.mxu0 %v190
    %290 = vmatprep.subr.mxu0 %v189
    %291 = vmatpush1.msra.mxu0 %v188
    %292 = vmatprep.subr.mxu0 %v187
    %293 = vmatpush1.msra.mxu0 %v186
    %294 = vmatprep.subr.mxu0 %v249
    %295 = vmatpush2.msra.mxu0 %v248
    %296 = vmatprep.subr.mxu0 %v247
    %297 = vmatpush2.msra.mxu0 %v246
    %298 = vmatprep.subr.mxu0 %v245
    %299 = vmatpush2.msra.mxu0 %v244
    %300 = vmatprep.subr.mxu0 %v243
    %301 = vmatpush2.msra.mxu0 %v242
    %302 = vmatprep.subr.mxu0 %v241
    %303 = vmatpush2.msra.mxu0 %v240
    %304 = vmatprep.subr.mxu0 %v239
    %305 = vmatpush2.msra.mxu0 %v238
    %306 = vmatprep.subr.mxu0 %v237
    %307 = vmatpush2.msra.mxu0 %v236
    %308 = vmatprep.subr.mxu0 %v235
    %309 = vmatpush2.msra.mxu0 %v234
    %310 = vmatprep.subr.mxu0 %v233
    %311 = vmatpush2.msra.mxu0 %v232
    %312 = vmatprep.subr.mxu0 %v231
    %313 = vmatpush2.msra.mxu0 %v230
    %314 = vmatprep.subr.mxu0 %v229
    %315 = vmatpush2.msra.mxu0 %v228
    %316 = vmatprep.subr.mxu0 %v227
    %317 = vmatpush2.msra.mxu0 %v226
    %318 = vmatprep.subr.mxu0 %v225
    %319 = vmatpush2.msra.mxu0 %v224
    %320 = vmatprep.subr.mxu0 %v223
    %321 = vmatpush2.msra.mxu0 %v222
    %322 = vmatprep.subr.mxu0 %v221
    %323 = vmatpush2.msra.mxu0 %v220
    %324 = vmatprep.subr.mxu0 %v219
    %325 = vmatpush2.msra.mxu0 %v218
    %326 = vmatprep.mubr.f32.mxu0 %v185
    %327 = vmatmul.mubr.f32.gmra.mxu0 %v184
    %v328 = vpop.f32.mrf.mxu0
    %v329 = vadd.f32 %v255, %v328
    %v330 = vpop.f32.mrf.mxu0
    %v331 = vadd.f32 %v259, %v330
    %332 = vdwg.mxu0
    %v333 = vmax.f32 %v329, 0.0
    %v334 = vmax.f32 %v331, 0.0
    %v335 = vld [vmem:[#allocation7] sm:$0xff]
    %v336 = vld [vmem:[#allocation7 + $0x8] sm:$0xff]
    %v337 = vld [vmem:[#allocation7 + $0x10] sm:$0xff]
    %v338 = vld [vmem:[#allocation7 + $0x18] sm:$0xff]
    %v339 = vld [vmem:[#allocation7 + $0x20] sm:$0xff]
    %v340 = vld [vmem:[#allocation7 + $0x28] sm:$0xff]
    %v341 = vld [vmem:[#allocation7 + $0x30] sm:$0xff]
    %v342 = vld [vmem:[#allocation7 + $0x38] sm:$0xff]
    %v343 = vld [vmem:[#allocation7 + $0x40] sm:$0xff]
    %v344 = vld [vmem:[#allocation7 + $0x48] sm:$0xff]
    %v345 = vld [vmem:[#allocation7 + $0x50] sm:$0xff]
    %v346 = vld [vmem:[#allocation7 + $0x58] sm:$0xff]
    %v347 = vld [vmem:[#allocation7 + $0x60] sm:$0xff]
    %v348 = vld [vmem:[#allocation7 + $0x68] sm:$0xff]
    %v349 = vld [vmem:[#allocation7 + $0x70] sm:$0xff]
    %v350 = vld [vmem:[#allocation7 + $0x78] sm:$0xff]
    %v351 = vld [vmem:[#allocation7 + $0x80] sm:$0xff]
    %v352 = vld [vmem:[#allocation7 + $0x88] sm:$0xff]
    %v353 = vld [vmem:[#allocation7 + $0x90] sm:$0xff]
    %v354 = vld [vmem:[#allocation7 + $0x98] sm:$0xff]
    %v355 = vld [vmem:[#allocation7 + $0xa0] sm:$0xff]
    %v356 = vld [vmem:[#allocation7 + $0xa8] sm:$0xff]
    %v357 = vld [vmem:[#allocation7 + $0xb0] sm:$0xff]
    %v358 = vld [vmem:[#allocation7 + $0xb8] sm:$0xff]
    %v359 = vld [vmem:[#allocation7 + $0xc0] sm:$0xff]
    %v360 = vld [vmem:[#allocation7 + $0xc8] sm:$0xff]
    %v361 = vld [vmem:[#allocation7 + $0xd0] sm:$0xff]
    %v362 = vld [vmem:[#allocation7 + $0xd8] sm:$0xff]
    %v363 = vld [vmem:[#allocation7 + $0xe0] sm:$0xff]
    %v364 = vld [vmem:[#allocation7 + $0xe8] sm:$0xff]
    %v365 = vld [vmem:[#allocation7 + $0xf0] sm:$0xff]
    %v366 = vld [vmem:[#allocation7 + $0xf8] sm:$0xff]
    %v367 = vld [vmem:[%s6] sm:$0x1]
    %v369 = vlaneseq
    %v370 = vshrl.u32 %v369, 7
    %v371 = vsub.s32 0, %v370
    %v372 = vrot.slane %v367, %v371
    %374 = vmatprep.subr.mxu0 0.0
    %375 = vmatpush1.msra.mxu0 %v350
    %376 = vmatprep.subr.mxu0 0.0
    %377 = vmatpush1.msra.mxu0 %v349
    %378 = vmatprep.subr.mxu0 0.0
    %379 = vmatpush1.msra.mxu0 %v348
    %380 = vmatprep.subr.mxu0 0.0
    %381 = vmatpush1.msra.mxu0 %v347
    %382 = vmatprep.subr.mxu0 0.0
    %383 = vmatpush1.msra.mxu0 %v346
    %384 = vmatprep.subr.mxu0 0.0
    %385 = vmatpush1.msra.mxu0 %v345
    %386 = vmatprep.subr.mxu0 0.0
    %387 = vmatpush1.msra.mxu0 %v344
    %388 = vmatprep.subr.mxu0 0.0
    %389 = vmatpush1.msra.mxu0 %v343
    %390 = vmatprep.subr.mxu0 0.0
    %391 = vmatpush1.msra.mxu0 %v342
    %392 = vmatprep.subr.mxu0 0.0
    %393 = vmatpush1.msra.mxu0 %v341
    %394 = vmatprep.subr.mxu0 0.0
    %395 = vmatpush1.msra.mxu0 %v340
    %396 = vmatprep.subr.mxu0 0.0
    %397 = vmatpush1.msra.mxu0 %v339
    %398 = vmatprep.subr.mxu0 0.0
    %399 = vmatpush1.msra.mxu0 %v338
    %400 = vmatprep.subr.mxu0 0.0
    %401 = vmatpush1.msra.mxu0 %v337
    %402 = vmatprep.subr.mxu0 0.0
    %403 = vmatpush1.msra.mxu0 %v336
    %404 = vmatprep.subr.mxu0 0.0
    %405 = vmatpush1.msra.mxu0 %v335
    %406 = vmatprep.subr.mxu0 0.0
    %407 = vmatpush2.msra.mxu0 %v366
    %408 = vmatprep.subr.mxu0 0.0
    %409 = vmatpush2.msra.mxu0 %v365
    %410 = vmatprep.subr.mxu0 0.0
    %411 = vmatpush2.msra.mxu0 %v364
    %412 = vmatprep.subr.mxu0 0.0
    %413 = vmatpush2.msra.mxu0 %v363
    %414 = vmatprep.subr.mxu0 0.0
    %415 = vmatpush2.msra.mxu0 %v362
    %416 = vmatprep.subr.mxu0 0.0
    %417 = vmatpush2.msra.mxu0 %v361
    %418 = vmatprep.subr.mxu0 0.0
    %419 = vmatpush2.msra.mxu0 %v360
    %420 = vmatprep.subr.mxu0 0.0
    %421 = vmatpush2.msra.mxu0 %v359
    %422 = vmatprep.subr.mxu0 0.0
    %423 = vmatpush2.msra.mxu0 %v358
    %424 = vmatprep.subr.mxu0 0.0
    %425 = vmatpush2.msra.mxu0 %v357
    %426 = vmatprep.subr.mxu0 0.0
    %427 = vmatpush2.msra.mxu0 %v356
    %428 = vmatprep.subr.mxu0 0.0
    %429 = vmatpush2.msra.mxu0 %v355
    %430 = vmatprep.subr.mxu0 0.0
    %431 = vmatpush2.msra.mxu0 %v354
    %432 = vmatprep.subr.mxu0 0.0
    %433 = vmatpush2.msra.mxu0 %v353
    %434 = vmatprep.subr.mxu0 0.0
    %435 = vmatpush2.msra.mxu0 %v352
    %436 = vmatprep.subr.mxu0 0.0
    %437 = vmatpush2.msra.mxu0 %v351
    %438 = vmatprep.mubr.f32.mxu0 %v334
    %439 = vmatmul.mubr.f32.gmra.mxu0 %v333
    %v440 = vpop.f32.mrf.mxu0
    %v441 = vadd.f32 %v372, %v440
    %v442 = vpop.f32.mrf.mxu0
    %443 = vdwg.mxu0
    %444 = vst [vmem:[#allocation8] sm:$0xff] %v441
    // Predicated region
    $region42: #{mlp_forward_padded.1} parent=1 // pred_check
      _
    $region43: #{mlp_forward_padded.1} parent=1 // pred_check_branch
      %446 = sbr.rel (0) target = $region45
    $region44: #{mlp_forward_padded.1} parent=1 // pred_region
      %s448 = ssub.s32 128, 128
      %449 = vsyncadd [#allocation4], %s448
      %s451 = sshll.u32 [#allocation8], 4
      %s452 = int_to_ptr.vmem [resolvable:$true] %s451
      %454 = dma.vmem_to_hbm [thread:$0]  %s452, 128, %s7, [#allocation4]
    $region45: #{mlp_forward_padded.1} parent=1 // pred_fallthru
      _
    // Predicated region
    $region46: #{mlp_forward_padded.1} parent=1 // pred_check
      _
    $region47: #{mlp_forward_padded.1} parent=1 // pred_check_branch
      %456 = sbr.rel (0) target = $region49
    $region48: #{mlp_forward_padded.1} parent=1 // pred_region
      %457 = dma.done [#allocation4], 128
    $region49: #{mlp_forward_padded.1} parent=1 // pred_fallthru
      _
    %458 = vsyncpa [#allocation3], 1
    %459 = vsyncpa [#allocation6], 1
    %460 = vsyncpa [#allocation4], 1

</llo_original>
